<compile_context>
chip_gen: v6e
topology: v6e:2x2x1
jax: 0.10.0
libtpu: 0.0.40
codegen_flags: <defaults>
</compile_context>

<pallas_src>
import functools

import numpy as np
import jax
import jax.numpy as jnp
from jax.experimental import pallas as pl
from jax.experimental.pallas import tpu as pltpu


def _cds2hg_kernel(x_ref, b_ref, t3_ref, t_ref, mat_ref, h_ref, *, tau, alpha):
    x = x_ref[...]                                   # [TN, F]  f32
    tn = x.shape[0]
    c = mat_ref.shape[-1]

    # F.normalize(p=2, dim=-1): x / max(||x||_2, 1e-12)  via EUP rsqrt
    ss = jnp.sum(x * x, axis=-1, keepdims=True)
    xn = x * jax.lax.rsqrt(jnp.maximum(ss, 1e-24))

    # Fused mahalanobis distance: one MXU matmul, K = 2F, bf16 in / f32 acc.
    #   d[n,c] = sum_f xn^2[n,f]*iv[c,f] - 2*sum_f xn[n,f]*(mu*iv)[c,f] + t3[c]
    a = jnp.concatenate([xn * xn, xn], axis=-1).astype(jnp.bfloat16)   # [TN, 2F]
    d = jnp.dot(a, b_ref[...], preferred_element_type=jnp.float32)     # [TN, C]
    d = jnp.maximum(d + t3_ref[...], 0.0)    # clamp: expansion can go slightly <0

    # softmax(-tau * d, dim=1)
    logits = -tau * d
    m = jnp.max(logits, axis=-1, keepdims=True)
    e = jnp.exp(logits - m)
    mat = e * pl.reciprocal(jnp.sum(e, axis=-1, keepdims=True), approx=True)
    mat_ref[...] = mat                                                  # [TN, C]

    # one-hot labels rebuilt in-kernel from int32 labels (no dense P input)
    p = (jax.lax.broadcasted_iota(jnp.int32, (tn, c), 1) == t_ref[...]).astype(
        jnp.float32)
    exp_term = jnp.exp(-alpha * d)
    h_ref[...] = p + exp_term * (1.0 - p)                               # [TN, C]


def cds2hg_pallas(X, means, log_vars, T, tau, alpha, block_n=256):
    N, F = X.shape
    C = means.shape[0]

    # ---- grid-invariant class-side prep (tiny [C, F] XLA ops, hoisted) ----
    mun = means * jax.lax.rsqrt(
        jnp.maximum(jnp.sum(means * means, axis=-1, keepdims=True), 1e-24))
    iv = jnp.exp(-jnp.clip(log_vars, 0.0, 6.0))                  # exp(-relu6(lv))
    B = jnp.concatenate([iv, -2.0 * mun * iv], axis=-1).T        # [2F, C]
    B = B.astype(jnp.bfloat16)
    t3 = jnp.sum(mun * mun * iv, axis=-1, keepdims=True).T       # [1, C] f32
    t3 = t3.astype(jnp.float32)

    # ---- tile over N (pad to a multiple of the tile) ----
    TN = min(int(block_n), int(N))
    TN = max(8, (TN // 8) * 8)
    Np = pl.cdiv(N, TN) * TN
    Xp = X.astype(jnp.float32)
    Tp = T.astype(jnp.int32)
    if Np != N:
        Xp = jnp.pad(Xp, ((0, Np - N), (0, 0)))
        Tp = jnp.pad(Tp, (0, Np - N))
    T2 = Tp.reshape(Np, 1)

    kern = functools.partial(_cds2hg_kernel, tau=float(tau), alpha=float(alpha))
    mat, h_full = pl.pallas_call(
        kern,
        grid=(Np // TN,),
        in_specs=[
            pl.BlockSpec((TN, F), lambda i: (i, 0)),        # X tile
            pl.BlockSpec((2 * F, C), lambda i: (0, 0)),     # fused class matrix
            pl.BlockSpec((1, C), lambda i: (0, 0)),         # t3 bias row
            pl.BlockSpec((TN, 1), lambda i: (i, 0)),        # int labels
        ],
        out_specs=(
            pl.BlockSpec((TN, C), lambda i: (i, 0)),        # softmax matrix
            pl.BlockSpec((TN, C), lambda i: (i, 0)),        # H (all classes)
        ),
        out_shape=(
            jax.ShapeDtypeStruct((Np, C), jnp.float32),
            jax.ShapeDtypeStruct((Np, C), jnp.float32),
        ),
        compiler_params=pltpu.CompilerParams(
            dimension_semantics=("parallel",)),
    )(Xp, B, t3, T2)
    return mat[:N], h_full[:N]


if __name__ == "__main__":
    nb_classes, sz_embed, N = 8, 32, 16
    tau, alpha = 32.0, 0.9

    key = jax.random.PRNGKey(0)
    k1, k2, k3, k4 = jax.random.split(key, 4)

    # nn.init.kaiming_normal_(mode='fan_out') on a [C, F] tensor:
    # std = sqrt(2 / fan_out) with fan_out = C (deterministic synthetic init).
    std = np.sqrt(2.0 / nb_classes).astype(np.float32)
    means = jax.random.normal(k1, (nb_classes, sz_embed), jnp.float32) * std
    log_vars = jax.random.normal(k2, (nb_classes, sz_embed), jnp.float32) * std

    X = jax.random.normal(k3, (N, sz_embed), jnp.float32)
    T = jax.random.randint(k4, (N,), 0, nb_classes, jnp.int32)

    mat, H_full = cds2hg_pallas(X, means, log_vars, T, tau, alpha)
    jax.block_until_ready((mat, H_full))

    # --- host-side glue for the data-dependent-shape steps ------------------
    # TODO(synk): `loss[non_zero]` and `distance[:, class_within_batch]` have
    # dynamic shapes; they are applied here on the kernel outputs.
    mat_np = np.asarray(mat)
    T_np = np.asarray(T)
    s = mat_np[np.arange(N), T_np]            # == sum(mat * P_one_hot, dim=1)
    non_zero = s != 0
    loss = float(-np.log(s[non_zero]).mean())
    class_within_batch = np.unique(T_np)      # == nonzero(P_one_hot.sum(0) != 0)
    H = np.asarray(H_full)[:, class_within_batch]

    assert np.isfinite(loss)
    assert H.shape == (N, class_within_batch.shape[0])
    assert np.all(np.isfinite(H))
    print("KERNEL_OK")
</pallas_src>

<mosaic_0001>
module attributes {stable_mosaic.version = 11 : i64} {
  func.func @_cds2hg_kernel(%arg0: i32, %arg1: memref<16x32xf32, #tpu.memory_space<vmem>>, %arg2: memref<64x8xbf16, #tpu.memory_space<vmem>>, %arg3: memref<1x8xf32, #tpu.memory_space<vmem>>, %arg4: memref<16x1xi32, #tpu.memory_space<vmem>>, %arg5: memref<16x8xf32, #tpu.memory_space<vmem>>, %arg6: memref<16x8xf32, #tpu.memory_space<vmem>>) attributes {dimension_semantics = [#tpu.dimension_semantics<parallel>], iteration_bounds = array<i64: 1>, scalar_prefetch = 0 : i64, scratch_operands = 0 : i64, tpu.core_type = #tpu.core_type<tc>, window_params = [{transform_indices = @transform_0, window_bounds = array<i64: 16, 32>}, {pipeline_mode = #tpu.pipeline_mode<synchronous>, transform_indices = @transform_1, window_bounds = array<i64: 64, 8>}, {pipeline_mode = #tpu.pipeline_mode<synchronous>, transform_indices = @transform_2, window_bounds = array<i64: 1, 8>}, {transform_indices = @transform_3, window_bounds = array<i64: 16, 1>}, {transform_indices = @transform_4, window_bounds = array<i64: 16, 8>}, {transform_indices = @transform_5, window_bounds = array<i64: 16, 8>}]} {
    %c0 = arith.constant 0 : index
    %c0_0 = arith.constant 0 : index
    %0 = vector.load %arg1[%c0, %c0_0] : memref<16x32xf32, #tpu.memory_space<vmem>>, vector<16x32xf32>
    %1 = arith.mulf %0, %0 : vector<16x32xf32>
    %cst = arith.constant dense<0.000000e+00> : vector<16xf32>
    %2 = vector.multi_reduction <add>, %1, %cst [1] : vector<16x32xf32> to vector<16xf32>
    %3 = vector.shape_cast %2 : vector<16xf32> to vector<16x1xf32>
    %cst_1 = arith.constant 1.000000e-24 : f32
    %4 = vector.broadcast %cst_1 : f32 to vector<16x1xf32>
    %5 = arith.maximumf %3, %4 : vector<16x1xf32>
    %6 = math.rsqrt %5 : vector<16x1xf32>
    %7 = vector.broadcast %6 : vector<16x1xf32> to vector<16x32xf32>
    %8 = arith.mulf %0, %7 : vector<16x32xf32>
    %9 = arith.mulf %8, %8 : vector<16x32xf32>
    %10 = tpu.concatenate %9, %8 in 1 : vector<16x32xf32>, vector<16x32xf32> -> vector<16x64xf32>
    %11 = arith.truncf %10 : vector<16x64xf32> to vector<16x64xbf16>
    %c0_2 = arith.constant 0 : index
    %c0_3 = arith.constant 0 : index
    %12 = vector.load %arg2[%c0_2, %c0_3] : memref<64x8xbf16, #tpu.memory_space<vmem>>, vector<64x8xbf16>
    %cst_4 = arith.constant dense<0.000000e+00> : vector<16x8xf32>
    %13 = tpu.matmul %11, %12, %cst_4 {dimension_numbers = #tpu.dot_dimension_numbers<[1], [0], [0], [1], [0, 0, 1, 1], [], []>} : vector<16x64xbf16>, vector<64x8xbf16>, vector<16x8xf32> -> vector<16x8xf32>
    %c0_5 = arith.constant 0 : index
    %c0_6 = arith.constant 0 : index
    %14 = vector.load %arg3[%c0_5, %c0_6] : memref<1x8xf32, #tpu.memory_space<vmem>>, vector<1x8xf32>
    %15 = vector.broadcast %14 : vector<1x8xf32> to vector<16x8xf32>
    %16 = arith.addf %13, %15 : vector<16x8xf32>
    %cst_7 = arith.constant 0.000000e+00 : f32
    %17 = vector.broadcast %cst_7 : f32 to vector<16x8xf32>
    %18 = arith.maximumf %16, %17 : vector<16x8xf32>
    %cst_8 = arith.constant -3.200000e+01 : f32
    %19 = vector.broadcast %cst_8 : f32 to vector<16x8xf32>
    %20 = arith.mulf %19, %18 : vector<16x8xf32>
    %cst_9 = arith.constant dense<0xFF800000> : vector<16xf32>
    %21 = vector.multi_reduction <maximumf>, %20, %cst_9 [1] : vector<16x8xf32> to vector<16xf32>
    %22 = vector.shape_cast %21 : vector<16xf32> to vector<16x1xf32>
    %23 = vector.broadcast %22 : vector<16x1xf32> to vector<16x8xf32>
    %24 = arith.subf %20, %23 : vector<16x8xf32>
    %25 = math.exp %24 : vector<16x8xf32>
    %cst_10 = arith.constant dense<0.000000e+00> : vector<16xf32>
    %26 = vector.multi_reduction <add>, %25, %cst_10 [1] : vector<16x8xf32> to vector<16xf32>
    %27 = vector.shape_cast %26 : vector<16xf32> to vector<16x1xf32>
    %28 = tpu.reciprocal %27 {approx = true} : vector<16x1xf32> -> vector<16x1xf32>
    %29 = vector.broadcast %28 : vector<16x1xf32> to vector<16x8xf32>
    %30 = arith.mulf %25, %29 : vector<16x8xf32>
    %c0_11 = arith.constant 0 : index
    %c0_12 = arith.constant 0 : index
    %31 = vector.load %arg5[%c0_11, %c0_12] : memref<16x8xf32, #tpu.memory_space<vmem>>, vector<16x8xf32>
    tpu.vector_store %arg5[%c0_11, %c0_12], %30 {strides = array<i32>} : memref<16x8xf32, #tpu.memory_space<vmem>>, vector<16x8xf32>,
    %32 = tpu.iota {dimensions = array<i32: 1>} : vector<16x8xi32>
    %c0_13 = arith.constant 0 : index
    %c0_14 = arith.constant 0 : index
    %33 = vector.load %arg4[%c0_13, %c0_14] : memref<16x1xi32, #tpu.memory_space<vmem>>, vector<16x1xi32>
    %34 = vector.broadcast %33 : vector<16x1xi32> to vector<16x8xi32>
    %35 = arith.cmpi eq, %32, %34 : vector<16x8xi32>
    %36 = arith.extui %35 : vector<16x8xi1> to vector<16x8xi32>
    %37 = arith.sitofp %36 : vector<16x8xi32> to vector<16x8xf32>
    %cst_15 = arith.constant -0.899999976 : f32
    %38 = vector.broadcast %cst_15 : f32 to vector<16x8xf32>
    %39 = arith.mulf %38, %18 : vector<16x8xf32>
    %40 = math.exp %39 : vector<16x8xf32>
    %cst_16 = arith.constant 1.000000e+00 : f32
    %41 = vector.broadcast %cst_16 : f32 to vector<16x8xf32>
    %42 = arith.subf %41, %37 : vector<16x8xf32>
    %43 = arith.mulf %40, %42 : vector<16x8xf32>
    %44 = arith.addf %37, %43 : vector<16x8xf32>
    %c0_17 = arith.constant 0 : index
    %c0_18 = arith.constant 0 : index
    %45 = vector.load %arg6[%c0_17, %c0_18] : memref<16x8xf32, #tpu.memory_space<vmem>>, vector<16x8xf32>
    tpu.vector_store %arg6[%c0_17, %c0_18], %44 {strides = array<i32>} : memref<16x8xf32, #tpu.memory_space<vmem>>, vector<16x8xf32>,
    return
  }
  func.func @transform_0(%arg0: i32) -> (i32, i32) {
    %c0_i32 = arith.constant 0 : i32
    %c0_i32_0 = arith.constant 0 : i32
    return %arg0, %c0_i32 : i32, i32
  }
  func.func @transform_1(%arg0: i32) -> (i32, i32) {
    %c0_i32 = arith.constant 0 : i32
    %c0_i32_0 = arith.constant 0 : i32
    %c0_i32_1 = arith.constant 0 : i32
    return %c0_i32, %c0_i32_0 : i32, i32
  }
  func.func @transform_2(%arg0: i32) -> (i32, i32) {
    %c0_i32 = arith.constant 0 : i32
    %c0_i32_0 = arith.constant 0 : i32
    %c0_i32_1 = arith.constant 0 : i32
    return %c0_i32, %c0_i32_0 : i32, i32
  }
  func.func @transform_3(%arg0: i32) -> (i32, i32) {
    %c0_i32 = arith.constant 0 : i32
    %c0_i32_0 = arith.constant 0 : i32
    return %arg0, %c0_i32 : i32, i32
  }
  func.func @transform_4(%arg0: i32) -> (i32, i32) {
    %c0_i32 = arith.constant 0 : i32
    %c0_i32_0 = arith.constant 0 : i32
    return %arg0, %c0_i32 : i32, i32
  }
  func.func @transform_5(%arg0: i32) -> (i32, i32) {
    %c0_i32 = arith.constant 0 : i32
    %c0_i32_0 = arith.constant 0 : i32
    return %arg0, %c0_i32 : i32, i32
  }
}

</mosaic_0001>

<llo_original>
// kernel: tpu_custom_call.1
$region0: #{tpu_custom_call.1}
  #allocation0 [shape = 'u32[]', space=smem, size = 0x4, offset = 0x4, fixed_abs, tag = 'smem constant byte address 0x4 - core index']
  #allocation1 [shape = 'u32[144,128]{1,0:T(1,128)}', space=vmem, size = 0x12000, scoped, tag = 'internal scratch']
  %s0 = inlined_call_operand.vmem [shape: f32[16,32], index: 0, kind: input, shape index: {}]
  %s1 = inlined_call_operand.vmem [shape: bf16[64,8], index: 1, kind: input, shape index: {}]
  %s2 = inlined_call_operand.vmem [shape: f32[1,8], index: 2, kind: input, shape index: {}]
  %s3 = inlined_call_operand.vmem [shape: s32[16,1], index: 3, kind: input, shape index: {}]
  %s4 = inlined_call_operand.vmem [shape: f32[16,8], index: 4, kind: output, shape index: {0}]
  %s5 = inlined_call_operand.vmem [shape: f32[16,8], index: 5, kind: output, shape index: {1}]
  %6 = xla_tuple %s4, %s5
  %s7 = sld [smem:[#allocation0]]
  $region34: #{tpu_custom_call.1} parent=0
    _
  %s9 = ssub.s32 1, %s7
  %s10 = scalar_select 0, %s9, %s7
  // Predicated region
  $region2: #{tpu_custom_call.1} parent=0 // pred_check
    _
  $region3: #{tpu_custom_call.1} parent=0 // pred_check_branch
    %12 = sbr.rel (0) target = $region5
  $region4: #{tpu_custom_call.1} parent=0 // pred_region
    _
  $region5: #{tpu_custom_call.1} parent=0 // pred_fallthru
    _
  // Predicated region
  $region6: #{tpu_custom_call.1} parent=0 // pred_check
    _
  $region7: #{tpu_custom_call.1} parent=0 // pred_check_branch
    %14 = sbr.rel (0) target = $region9
  $region8: #{tpu_custom_call.1} parent=0 // pred_region
    _
  $region9: #{tpu_custom_call.1} parent=0 // pred_fallthru
    _
  // Predicated region
  $region10: #{tpu_custom_call.1} parent=0 // pred_check
    _
  $region11: #{tpu_custom_call.1} parent=0 // pred_check_branch
    %16 = sbr.rel (0) target = $region13
  $region12: #{tpu_custom_call.1} parent=0 // pred_region
    _
  $region13: #{tpu_custom_call.1} parent=0 // pred_fallthru
    _
  // Predicated region
  $region14: #{tpu_custom_call.1} parent=0 // pred_check
    _
  $region15: #{tpu_custom_call.1} parent=0 // pred_check_branch
    %18 = sbr.rel (0) target = $region17
  $region16: #{tpu_custom_call.1} parent=0 // pred_region
    _
  $region17: #{tpu_custom_call.1} parent=0 // pred_fallthru
    _
  %v20 = vld [vmem:[%s0] sm:$0xff]
  %v21 = vld [vmem:[%s0 + $0x8] sm:$0xff]
  %v22 = vmul.f32 %v20, %v20
  %v23 = vmul.f32 %v21, %v21
  %vm24 = vcmask 261120
  %v25 = vsel %vm24, %v22, 0.0
  %26 = vadd.xlane.f32.xlu0 %v25
  %v27 = vpop.xlane.xlu0 %26
  %v28 = vsel %vm24, %v23, 0.0
  %29 = vadd.xlane.f32.xlu0 %v28
  %v30 = vpop.xlane.xlu0 %29
  %v31 = vmax.f32 %v27, 1e-24
  %v32 = vmax.f32 %v30, 1e-24
  %v33 = vrsqrt.pop %v31
  %v34 = vrsqrt.pop %v32
  %v35 = vmul.f32 %v20, %v33
  %v36 = vmul.f32 %v21, %v34
  %v37 = vmul.f32 %v35, %v35
  %v38 = vmul.f32 %v36, %v36
  %41 = vrot.lane.b32.xlu0 %v35, 32
  %v42 = vpop.permute.xlu0 %41
  %43 = vrot.lane.b32.xlu0 %v36, 32
  %v44 = vpop.permute.xlu0 %43
  %v47 = vsel %vm24, %v37, %v42
  %v48 = vsel %vm24, %v38, %v44
  %v49 = vpack.c.bf16 %v48, %v47
  %v50 = vld [vmem:[%s1] sm:$0xf]
  %v51 = vld [vmem:[%s1 + $0x4] sm:$0xf]
  %v52 = vld [vmem:[%s1 + $0x8] sm:$0xf]
  %v53 = vld [vmem:[%s1 + $0xc] sm:$0xf]
  %v54 = vld [vmem:[%s1 + $0x10] sm:$0xf]
  %v55 = vld [vmem:[%s1 + $0x14] sm:$0xf]
  %v56 = vld [vmem:[%s1 + $0x18] sm:$0xf]
  %v57 = vld [vmem:[%s1 + $0x1c] sm:$0xf]
  %v58 = vld [vmem:[%s2] sm:$0x1]
  %v60 = vlaneseq
  %v61 = vshrl.u32 %v60, 7
  %v62 = vsub.s32 0, %v61
  %v63 = vrot.slane %v58, %v62
  %v73 = vunpack.c.l.b16 %v50
  %v74 = vunpack.c.l.b16 %v51
  %v75 = vunpack.c.l.b16 %v52
  %v76 = vunpack.c.l.b16 %v53
  %v77 = vunpack.c.l.b16 %v54
  %v78 = vunpack.c.l.b16 %v55
  %v79 = vunpack.c.l.b16 %v56
  %v80 = vunpack.c.l.b16 %v57
  %v81 = vpack.c.b16 %v74, %v73
  %v82 = vpack.c.b16 %v76, %v75
  %v83 = vpack.c.b16 %v78, %v77
  %v84 = vpack.c.b16 %v80, %v79
  %vm89 = vcmask 523264
  %v91 = vsel %vm89, %v49, 0
  %93 = vmatprep.subr.bf16.mxu0 0
  %94 = vmatpush1.bf16.msra.mxu0 0
  %95 = vmatprep.subr.bf16.mxu0 0
  %96 = vmatpush1.bf16.msra.mxu0 0
  %97 = vmatprep.subr.bf16.mxu0 0
  %98 = vmatpush1.bf16.msra.mxu0 0
  %99 = vmatprep.subr.bf16.mxu0 0
  %100 = vmatpush1.bf16.msra.mxu0 0
  %101 = vmatprep.subr.bf16.mxu0 0
  %102 = vmatpush1.bf16.msra.mxu0 %v84
  %103 = vmatprep.subr.bf16.mxu0 0
  %104 = vmatpush1.bf16.msra.mxu0 %v83
  %105 = vmatprep.subr.bf16.mxu0 0
  %106 = vmatpush1.bf16.msra.mxu0 %v82
  %107 = vmatprep.subr.bf16.mxu0 0
  %108 = vmatpush1.bf16.msra.mxu0 %v81
  %109 = vmatprep.subr.bf16.mxu0 0
  %110 = vmatpush2.bf16.msra.mxu0 0
  %111 = vmatprep.subr.bf16.mxu0 0
  %112 = vmatpush2.bf16.msra.mxu0 0
  %113 = vmatprep.subr.bf16.mxu0 0
  %114 = vmatpush2.bf16.msra.mxu0 0
  %115 = vmatprep.subr.bf16.mxu0 0
  %116 = vmatpush2.bf16.msra.mxu0 0
  %117 = vmatprep.subr.bf16.mxu0 0
  %118 = vmatpush2.bf16.msra.mxu0 0
  %119 = vmatprep.subr.bf16.mxu0 0
  %120 = vmatpush2.bf16.msra.mxu0 0
  %121 = vmatprep.subr.bf16.mxu0 0
  %122 = vmatpush2.bf16.msra.mxu0 0
  %123 = vmatprep.subr.bf16.mxu0 0
  %124 = vmatpush2.bf16.msra.mxu0 0
  %125 = vmatprep.mubr.bf16.mxu0 0
  %126 = vmatmul.mubr.bf16.gmra.mxu0 %v91
  %v127 = vpop.f32.mrf.mxu0
  %v128 = vadd.f32 %v63, %v127
  %v129 = vpop.f32.mrf.mxu0
  %v130 = vpop.f32.mrf.mxu0
  %v131 = vadd.f32 %v63, %v130
  %v132 = vpop.f32.mrf.mxu0
  %133 = vdwg.mxu0
  %v134 = vmax.f32 %v128, 0.0
  %v135 = vmax.f32 %v131, 0.0
  %v136 = vmul.f32 %v134, -32.0
  %v137 = vmul.f32 %v135, -32.0
  %vm138 = vcmask 64512
  %v139 = vsel %vm138, %v136, -inf
  %140 = vmax.xlane.f32.xlu0 %v139
  %v141 = vpop.xlane.xlu0 %140
  %v142 = vsel %vm138, %v137, -inf
  %143 = vmax.xlane.f32.xlu0 %v142
  %v144 = vpop.xlane.xlu0 %143
  %v145 = vsub.f32 %v136, %v141
  %v146 = vsub.f32 %v137, %v144
  %v147 = vmul.f32 %v145, 1.442695
  %v148 = vpow.pop %v147
  %v149 = vmul.f32 %v146, 1.442695
  %v150 = vpow.pop %v149
  %v151 = vsel %vm138, %v148, 0.0
  %152 = vadd.xlane.f32.xlu0 %v151
  %v153 = vpop.xlane.xlu0 %152
  %v154 = vsel %vm138, %v150, 0.0
  %155 = vadd.xlane.f32.xlu0 %v154
  %v156 = vpop.xlane.xlu0 %155
  %v157 = vrcp.pop %v153
  %v158 = vrcp.pop %v156
  %v159 = vmul.f32 %v148, %v157
  %v160 = vmul.f32 %v150, %v158
  %161 = vst.msk [vmem:[%s4] sm:$0xff] %vm138, %v159
  %162 = vst.msk [vmem:[%s4 + $0x8] sm:$0xff] %vm138, %v160
  %v163 = vlaneseq
  %v164 = vand.u32 %v163, 127
  %v165 = vld [vmem:[%s3] sm:$0xff]
  %v166 = vld [vmem:[%s3 + $0x8] sm:$0xff]
  %167 = vset.pattern.permute.xlu0 0
  %168 = vperm.xlu0 %167, %v165
  %v169 = vpop.permute.xlu0 %168
  %170 = vset.pattern.permute.xlu0 0
  %171 = vperm.xlu0 %170, %v166
  %v172 = vpop.permute.xlu0 %171
  %vm173 = vcmp.eq.s32.totalorder %v164, %v169
  %vm174 = vcmp.eq.s32.totalorder %v164, %v172
  %v175 = vsel %vm173, 1, 0
  %v176 = vsel %vm174, 1, 0
  %v177 = vcvt.s32.f32 %v175
  %v178 = vcvt.s32.f32 %v176
  %v179 = vmul.f32 %v134, -0.9
  %v180 = vmul.f32 %v135, -0.9
  %v181 = vmul.f32 %v179, 1.442695
  %v182 = vpow.pop %v181
  %v183 = vmul.f32 %v180, 1.442695
  %v184 = vpow.pop %v183
  %v185 = vsub.f32 1.0, %v177
  %v186 = vsub.f32 1.0, %v178
  %v187 = vmul.f32 %v182, %v185
  %v188 = vmul.f32 %v184, %v186
  %v189 = vadd.f32 %v177, %v187
  %v190 = vadd.f32 %v178, %v188
  %191 = vst.msk [vmem:[%s5] sm:$0xff] %vm138, %v189
  %192 = vst.msk [vmem:[%s5 + $0x8] sm:$0xff] %vm138, %v190
  // Predicated region
  $region18: #{tpu_custom_call.1} parent=0 // pred_check
    _
  $region19: #{tpu_custom_call.1} parent=0 // pred_check_branch
    %194 = sbr.rel (0) target = $region21
  $region20: #{tpu_custom_call.1} parent=0 // pred_region
    _
  $region21: #{tpu_custom_call.1} parent=0 // pred_fallthru
    _
  // Predicated region
  $region22: #{tpu_custom_call.1} parent=0 // pred_check
    _
  $region23: #{tpu_custom_call.1} parent=0 // pred_check_branch
    %196 = sbr.rel (0) target = $region25
  $region24: #{tpu_custom_call.1} parent=0 // pred_region
    _
  $region25: #{tpu_custom_call.1} parent=0 // pred_fallthru
    _
  // Predicated region
  $region26: #{tpu_custom_call.1} parent=0 // pred_check
    _
  $region27: #{tpu_custom_call.1} parent=0 // pred_check_branch
    %198 = sbr.rel (0) target = $region29
  $region28: #{tpu_custom_call.1} parent=0 // pred_region
    _
  $region29: #{tpu_custom_call.1} parent=0 // pred_fallthru
    _
  // Predicated region
  $region30: #{tpu_custom_call.1} parent=0 // pred_check
    _
  $region31: #{tpu_custom_call.1} parent=0 // pred_check_branch
    %200 = sbr.rel (0) target = $region33
  $region32: #{tpu_custom_call.1} parent=0 // pred_region
    _
  $region33: #{tpu_custom_call.1} parent=0 // pred_fallthru
    _

</llo_original>
